<compile_context>
chip_gen: v6e
topology: v6e:2x2x1
jax: 0.10.0
libtpu: 0.0.40
codegen_flags: <defaults>
</compile_context>

<pallas_src>
import jax
import jax.numpy as jnp
from jax.experimental import pallas as pl
from jax.experimental.pallas import tpu as pltpu

LANE = 128
SUBLANE = 8
DEFAULT_TILE_B = 2048                 # ~<10 MiB VMEM; fine on v5e/v6e/v7x.
VMEM_LIMIT_BYTES = 32 * 1024 * 1024   # safe on all generations (v7x has 64 MiB).


def _round_up(n, m):
    return ((n + m - 1) // m) * m


def _supports_bf16_vpu():
    """v6e / v7x have a bf16 VPU; v5e (and older) do not."""
    try:
        kind = jax.devices()[0].device_kind.lower()
    except Exception:
        return False
    return any(tag in kind for tag in ("v6", "v7", "tpu7", "7x"))


# ---------------------------------------------------------------------------
# Kernel: one batch tile runs the whole fused 5-layer MLP on the MXU.
# ---------------------------------------------------------------------------
def _build_kernel(fold_first_bias, bf16_epilogue):
    def kernel(*refs):
        x_ref, o_ref = refs[0], refs[-1]
        mids = refs[1:-1]

        # Re-group (W, b) pairs; fc1 has no explicit bias when it is folded
        # into the zero-padded K dimension of W1 (constant-1 input column).
        pairs = []
        idx = 0
        first = True
        while idx < len(mids):
            w_ref = mids[idx]
            idx += 1
            if first and fold_first_bias:
                b_ref = None
            else:
                b_ref = mids[idx]
                idx += 1
            pairs.append((w_ref, b_ref))
            first = False

        cdt = pairs[0][0].dtype                  # compute dtype (bf16)
        h = x_ref[...].astype(cdt)
        n = len(pairs)
        for i, (w_ref, b_ref) in enumerate(pairs):
            # MXU matmul, f32 accumulation.
            y = jnp.dot(h, w_ref[...], preferred_element_type=jnp.float32)
            if i == n - 1:
                if b_ref is not None:
                    y = y + b_ref[...]           # f32 bias on the final layer
                o_ref[...] = y.astype(o_ref.dtype)   # lane-dense padded store
            elif bf16_epilogue:
                # bf16 bias-add + ReLU: half the VALU slot cost (v6e / v7x).
                yl = y.astype(cdt)
                if b_ref is not None:
                    yl = yl + b_ref[...].astype(cdt)
                h = jnp.maximum(yl, 0.0)
            else:
                # f32 epilogue (portable; v5e has no bf16 VPU).
                if b_ref is not None:
                    y = y + b_ref[...]
                h = jnp.maximum(y, 0.0).astype(cdt)
        return
    return kernel


# ---------------------------------------------------------------------------
# One-time parameter preparation (outside the hot path).
# ---------------------------------------------------------------------------
def prepare_params(params, param_dtype=jnp.bfloat16, fold_first_bias=True):
    """params: list of (W, b) in PyTorch layout (W: (out, in), b: (out,)).

    Returns (prepared, meta):
      prepared[i] = (W^T cast to param_dtype, bias as (1, out) f32 or None).
      * fc1's K dim is zero-padded to a lane multiple; when there is padding
        room, row `in_dim` of W1 holds fc1's bias (the wrapper feeds a
        constant-1 column there), folding the bias into the MXU matmul.
      * fc5's output dim is zero-padded to a lane multiple so the kernel's
        output store is lane-dense.
    """
    n = len(params)
    in_dim = int(params[0][0].shape[1])
    out_dim = int(params[-1][0].shape[0])
    out_pad = _round_up(max(out_dim, LANE), LANE)

    # Only fold if the lane padding already leaves room (otherwise it would
    # add a whole extra 128-wide K tile to the first matmul).
    fold_first_bias = bool(fold_first_bias) and (in_dim % LANE != 0)
    in_pad = _round_up(max(in_dim + (1 if fold_first_bias else 0), LANE), LANE)

    prepared = []
    for i, (W, b) in enumerate(params):
        Wt = jnp.asarray(W, jnp.float32).T                    # (in, out)
        bb = jnp.asarray(b, jnp.float32).reshape(1, -1)
        if i == 0 and in_pad != in_dim:
            Wt = jnp.pad(Wt, ((0, in_pad - in_dim), (0, 0)))
            if fold_first_bias:
                Wt = Wt.at[in_dim, :].set(bb[0])              # bias row
                bb = None
        if i == n - 1 and out_pad != out_dim:
            Wt = jnp.pad(Wt, ((0, 0), (0, out_pad - out_dim)))
            if bb is not None:
                bb = jnp.pad(bb, ((0, 0), (0, out_pad - out_dim)))
        prepared.append((Wt.astype(param_dtype), bb))

    meta = dict(in_dim=in_dim, in_pad=in_pad, out_dim=out_dim, out_pad=out_pad,
                fold_first_bias=fold_first_bias)
    return prepared, meta


# ---------------------------------------------------------------------------
# Tiling / spec helpers.
# ---------------------------------------------------------------------------
def _choose_tile(B, tile_b, min_grid_steps=2):
    b_min = _round_up(B, SUBLANE)
    if b_min <= tile_b:
        if b_min >= min_grid_steps * SUBLANE:
            # Split into >=2 grid steps so ("parallel",) semantics can shard
            # the batch across both v7x TensorCores.
            tile = _round_up((b_min + min_grid_steps - 1) // min_grid_steps,
                             SUBLANE)
            return tile, _round_up(b_min, tile)
        return b_min, b_min
    tile = _round_up(tile_b, SUBLANE)
    return tile, _round_up(B, tile)


def _resident_spec(shape):
    """Constant-index block: stays resident in VMEM, DMA'd once. Single
    buffering requested since the block never changes across grid steps."""
    index_map = lambda i: (0,) * len(shape)
    try:
        return pl.BlockSpec(shape, index_map, pipeline_mode=pl.Buffered(1))
    except Exception:   # older JAX without pipeline_mode / Buffered
        return pl.BlockSpec(shape, index_map)


# ---------------------------------------------------------------------------
# Forward pass.
# ---------------------------------------------------------------------------
def dqn_forward(x, prepared, meta, *, tile_b=DEFAULT_TILE_B,
                out_dtype=jnp.bfloat16, bf16_epilogue=None):
    """Fused 5-layer MLP forward.

    Returns the *padded* (B_pad, out_pad) output slab in `out_dtype`.
    Slice [:B, :meta['out_dim']] at the consumer (ideally fused into the next
    op); keeping the slice out of this function avoids a separate XLA pass
    that re-reads the whole padded output from HBM.
    """
    if bf16_epilogue is None:
        bf16_epilogue = _supports_bf16_vpu()

    x = jnp.asarray(x)
    B, in_dim = x.shape
    assert in_dim == meta["in_dim"], "input feature dim mismatch"

    compute_dtype = prepared[0][0].dtype
    tile, B_pad = _choose_tile(B, tile_b)

    # Lane-dense input: cast to the compute dtype, append the constant-1
    # bias column (when fc1's bias is folded) and zero-pad K to in_pad.
    # XLA fuses this into a single pass over x.
    cols = [x.astype(compute_dtype)]
    used = in_dim
    if meta["fold_first_bias"]:
        cols.append(jnp.ones((B, 1), compute_dtype))
        used += 1
    if meta["in_pad"] > used:
        cols.append(jnp.zeros((B, meta["in_pad"] - used), compute_dtype))
    xk = jnp.concatenate(cols, axis=1) if len(cols) > 1 else cols[0]
    if B_pad != B:
        xk = jnp.pad(xk, ((0, B_pad - B), (0, 0)))

    # Flatten args + specs. Weights/biases use constant index_maps so they
    # are DMA'd once and stay resident in VMEM across grid steps.
    flat_args = [xk]
    in_specs = [pl.BlockSpec((tile, meta["in_pad"]), lambda i: (i, 0))]
    for (W, b) in prepared:
        flat_args.append(W)
        in_specs.append(_resident_spec(W.shape))
        if b is not None:
            flat_args.append(b)
            in_specs.append(_resident_spec(b.shape))

    out_spec = pl.BlockSpec((tile, meta["out_pad"]), lambda i: (i, 0))
    grid = (B_pad // tile,)

    # Advisory cost estimate for XLA scheduling.
    flops = 2 * B_pad * sum(int(W.shape[0]) * int(W.shape[1])
                            for (W, _) in prepared)
    weight_bytes = sum(
        int(W.size) * W.dtype.itemsize
        + (int(b.size) * b.dtype.itemsize if b is not None else 0)
        for (W, b) in prepared)
    bytes_accessed = (weight_bytes
                      + B_pad * meta["in_pad"] * xk.dtype.itemsize
                      + B_pad * meta["out_pad"] * jnp.dtype(out_dtype).itemsize)
    cost = pl.CostEstimate(flops=flops, transcendentals=0,
                           bytes_accessed=bytes_accessed)

    kernel = _build_kernel(meta["fold_first_bias"], bf16_epilogue)

    return pl.pallas_call(
        kernel,
        out_shape=jax.ShapeDtypeStruct((B_pad, meta["out_pad"]), out_dtype),
        grid=grid,
        in_specs=in_specs,
        out_specs=out_spec,
        compiler_params=pltpu.CompilerParams(
            dimension_semantics=("parallel",),
            vmem_limit_bytes=VMEM_LIMIT_BYTES),
        cost_estimate=cost,
    )(*flat_args)


def dqn_apply(x, prepared, meta, **kwargs):
    """Convenience wrapper returning the logical (B, out_dim) result."""
    out = dqn_forward(x, prepared, meta, **kwargs)
    return out[: x.shape[0], : meta["out_dim"]]


# ---------------------------------------------------------------------------
# Init + references.
# ---------------------------------------------------------------------------
def init_params(key, input_dim, output_dim):
    """Deterministic init matching the PyTorch module's layer shapes."""
    dims = [(input_dim, 256), (256, 256), (256, 128), (128, 128),
            (128, output_dim)]
    params = []
    for i, (din, dout) in enumerate(dims):
        kw, kb, key = jax.random.split(jax.random.fold_in(key, i), 3)
        bound = 1.0 / (din ** 0.5)
        W = jax.random.uniform(kw, (dout, din), jnp.float32, -bound, bound)
        b = jax.random.uniform(kb, (dout,), jnp.float32, -bound, bound)
        params.append((W, b))
    return params


def dqn_reference_mixed(x, params, param_dtype=jnp.bfloat16):
    """Plain-JAX reference mirroring the kernel's precision
    (bf16 weights & activations, f32 accumulation)."""
    h = jnp.asarray(x, jnp.float32).astype(param_dtype)
    n = len(params)
    for i, (W, b) in enumerate(params):
        Wt = jnp.asarray(W, jnp.float32).T.astype(param_dtype)
        y = jnp.dot(h, Wt, preferred_element_type=jnp.float32)
        y = y + jnp.asarray(b, jnp.float32)
        if i < n - 1:
            h = jnp.maximum(y, 0.0).astype(param_dtype)
        else:
            h = y
    return h


def dqn_reference_f32(x, params):
    """Full-precision reference against the original PyTorch-layout params."""
    h = jnp.asarray(x, jnp.float32)
    for i, (W, b) in enumerate(params):
        h = h @ jnp.asarray(W, jnp.float32).T + jnp.asarray(b, jnp.float32)
        if i < len(params) - 1:
            h = jnp.maximum(h, 0.0)
    return h


if __name__ == "__main__":
    key = jax.random.PRNGKey(0)
    batch, input_dim, output_dim = 2, 32, 8

    kx, kp = jax.random.split(key)
    x = jax.random.normal(kx, (batch, input_dim), jnp.float32)
    params = init_params(kp, input_dim, output_dim)

    # Prepare params once (transpose / cast / pad / bias-fold) off the hot path.
    prepared, meta = prepare_params(params, param_dtype=jnp.bfloat16)

    out_padded = dqn_forward(x, prepared, meta)
    out_padded = jax.block_until_ready(out_padded)
    assert out_padded.shape == (8, meta["out_pad"])   # padded slab (B_pad, 128)

    # Consumer-side slice (kept out of the kernel wrapper on purpose).
    out = jnp.asarray(out_padded[:batch, :meta["out_dim"]], jnp.float32)
    assert out.shape == (batch, output_dim)
    assert bool(jnp.all(jnp.isfinite(out)))

    # Tight check vs. a reference that mirrors the kernel's mixed precision.
    ref_mixed = dqn_reference_mixed(x, params)
    assert jnp.allclose(out, ref_mixed, atol=3e-2, rtol=3e-2), \
        "mismatch vs mixed-precision JAX reference"

    # Loose sanity check vs. the full-f32 original model (bf16 rounding error).
    ref_f32 = dqn_reference_f32(x, params)
    assert jnp.allclose(out, ref_f32, atol=8e-2, rtol=8e-2), \
        "mismatch vs f32 JAX reference"

    print("KERNEL_OK")
</pallas_src>

<mosaic_0001>
module attributes {stable_mosaic.version = 11 : i64} {
  func.func @kernel(%arg0: i32, %arg1: memref<8x128xbf16, #tpu.memory_space<vmem>>, %arg2: memref<128x256xbf16, #tpu.memory_space<vmem>>, %arg3: memref<256x256xbf16, #tpu.memory_space<vmem>>, %arg4: memref<1x256xf32, #tpu.memory_space<vmem>>, %arg5: memref<256x128xbf16, #tpu.memory_space<vmem>>, %arg6: memref<1x128xf32, #tpu.memory_space<vmem>>, %arg7: memref<128x128xbf16, #tpu.memory_space<vmem>>, %arg8: memref<1x128xf32, #tpu.memory_space<vmem>>, %arg9: memref<128x128xbf16, #tpu.memory_space<vmem>>, %arg10: memref<1x128xf32, #tpu.memory_space<vmem>>, %arg11: memref<8x128xbf16, #tpu.memory_space<vmem>>) attributes {dimension_semantics = [#tpu.dimension_semantics<parallel>], iteration_bounds = array<i64: 1>, scalar_prefetch = 0 : i64, scratch_operands = 0 : i64, tpu.core_type = #tpu.core_type<tc>, window_params = [{transform_indices = @transform_0, window_bounds = array<i64: 8, 128>}, {pipeline_mode = #tpu.pipeline_mode<synchronous>, transform_indices = @transform_1, window_bounds = array<i64: 128, 256>}, {pipeline_mode = #tpu.pipeline_mode<synchronous>, transform_indices = @transform_2, window_bounds = array<i64: 256, 256>}, {pipeline_mode = #tpu.pipeline_mode<synchronous>, transform_indices = @transform_3, window_bounds = array<i64: 1, 256>}, {pipeline_mode = #tpu.pipeline_mode<synchronous>, transform_indices = @transform_4, window_bounds = array<i64: 256, 128>}, {pipeline_mode = #tpu.pipeline_mode<synchronous>, transform_indices = @transform_5, window_bounds = array<i64: 1, 128>}, {pipeline_mode = #tpu.pipeline_mode<synchronous>, transform_indices = @transform_6, window_bounds = array<i64: 128, 128>}, {pipeline_mode = #tpu.pipeline_mode<synchronous>, transform_indices = @transform_7, window_bounds = array<i64: 1, 128>}, {pipeline_mode = #tpu.pipeline_mode<synchronous>, transform_indices = @transform_8, window_bounds = array<i64: 128, 128>}, {pipeline_mode = #tpu.pipeline_mode<synchronous>, transform_indices = @transform_9, window_bounds = array<i64: 1, 128>}, {transform_indices = @transform_10, window_bounds = array<i64: 8, 128>}]} {
    %c0 = arith.constant 0 : index
    %c0_0 = arith.constant 0 : index
    %0 = vector.load %arg1[%c0, %c0_0] : memref<8x128xbf16, #tpu.memory_space<vmem>>, vector<8x128xbf16>
    %c0_1 = arith.constant 0 : index
    %c0_2 = arith.constant 0 : index
    %1 = vector.load %arg2[%c0_1, %c0_2] : memref<128x256xbf16, #tpu.memory_space<vmem>>, vector<128x256xbf16>
    %cst = arith.constant dense<0.000000e+00> : vector<8x256xf32>
    %2 = tpu.matmul %0, %1, %cst {dimension_numbers = #tpu.dot_dimension_numbers<[1], [0], [0], [1], [0, 0, 1, 1], [], []>} : vector<8x128xbf16>, vector<128x256xbf16>, vector<8x256xf32> -> vector<8x256xf32>
    %cst_3 = arith.constant 0.000000e+00 : f32
    %3 = vector.broadcast %cst_3 : f32 to vector<8x256xf32>
    %4 = arith.maximumf %2, %3 : vector<8x256xf32>
    %5 = arith.truncf %4 : vector<8x256xf32> to vector<8x256xbf16>
    %c0_4 = arith.constant 0 : index
    %c0_5 = arith.constant 0 : index
    %6 = vector.load %arg3[%c0_4, %c0_5] : memref<256x256xbf16, #tpu.memory_space<vmem>>, vector<256x256xbf16>
    %cst_6 = arith.constant dense<0.000000e+00> : vector<8x256xf32>
    %7 = tpu.matmul %5, %6, %cst_6 {dimension_numbers = #tpu.dot_dimension_numbers<[1], [0], [0], [1], [0, 0, 1, 1], [], []>} : vector<8x256xbf16>, vector<256x256xbf16>, vector<8x256xf32> -> vector<8x256xf32>
    %c0_7 = arith.constant 0 : index
    %c0_8 = arith.constant 0 : index
    %8 = vector.load %arg4[%c0_7, %c0_8] : memref<1x256xf32, #tpu.memory_space<vmem>>, vector<1x256xf32>
    %9 = vector.broadcast %8 : vector<1x256xf32> to vector<8x256xf32>
    %10 = arith.addf %7, %9 : vector<8x256xf32>
    %cst_9 = arith.constant 0.000000e+00 : f32
    %11 = vector.broadcast %cst_9 : f32 to vector<8x256xf32>
    %12 = arith.maximumf %10, %11 : vector<8x256xf32>
    %13 = arith.truncf %12 : vector<8x256xf32> to vector<8x256xbf16>
    %c0_10 = arith.constant 0 : index
    %c0_11 = arith.constant 0 : index
    %14 = vector.load %arg5[%c0_10, %c0_11] : memref<256x128xbf16, #tpu.memory_space<vmem>>, vector<256x128xbf16>
    %cst_12 = arith.constant dense<0.000000e+00> : vector<8x128xf32>
    %15 = tpu.matmul %13, %14, %cst_12 {dimension_numbers = #tpu.dot_dimension_numbers<[1], [0], [0], [1], [0, 0, 1, 1], [], []>} : vector<8x256xbf16>, vector<256x128xbf16>, vector<8x128xf32> -> vector<8x128xf32>
    %c0_13 = arith.constant 0 : index
    %c0_14 = arith.constant 0 : index
    %16 = vector.load %arg6[%c0_13, %c0_14] : memref<1x128xf32, #tpu.memory_space<vmem>>, vector<1x128xf32>
    %17 = vector.broadcast %16 : vector<1x128xf32> to vector<8x128xf32>
    %18 = arith.addf %15, %17 : vector<8x128xf32>
    %cst_15 = arith.constant 0.000000e+00 : f32
    %19 = vector.broadcast %cst_15 : f32 to vector<8x128xf32>
    %20 = arith.maximumf %18, %19 : vector<8x128xf32>
    %21 = arith.truncf %20 : vector<8x128xf32> to vector<8x128xbf16>
    %c0_16 = arith.constant 0 : index
    %c0_17 = arith.constant 0 : index
    %22 = vector.load %arg7[%c0_16, %c0_17] : memref<128x128xbf16, #tpu.memory_space<vmem>>, vector<128x128xbf16>
    %cst_18 = arith.constant dense<0.000000e+00> : vector<8x128xf32>
    %23 = tpu.matmul %21, %22, %cst_18 {dimension_numbers = #tpu.dot_dimension_numbers<[1], [0], [0], [1], [0, 0, 1, 1], [], []>} : vector<8x128xbf16>, vector<128x128xbf16>, vector<8x128xf32> -> vector<8x128xf32>
    %c0_19 = arith.constant 0 : index
    %c0_20 = arith.constant 0 : index
    %24 = vector.load %arg8[%c0_19, %c0_20] : memref<1x128xf32, #tpu.memory_space<vmem>>, vector<1x128xf32>
    %25 = vector.broadcast %24 : vector<1x128xf32> to vector<8x128xf32>
    %26 = arith.addf %23, %25 : vector<8x128xf32>
    %cst_21 = arith.constant 0.000000e+00 : f32
    %27 = vector.broadcast %cst_21 : f32 to vector<8x128xf32>
    %28 = arith.maximumf %26, %27 : vector<8x128xf32>
    %29 = arith.truncf %28 : vector<8x128xf32> to vector<8x128xbf16>
    %c0_22 = arith.constant 0 : index
    %c0_23 = arith.constant 0 : index
    %30 = vector.load %arg9[%c0_22, %c0_23] : memref<128x128xbf16, #tpu.memory_space<vmem>>, vector<128x128xbf16>
    %cst_24 = arith.constant dense<0.000000e+00> : vector<8x128xf32>
    %31 = tpu.matmul %29, %30, %cst_24 {dimension_numbers = #tpu.dot_dimension_numbers<[1], [0], [0], [1], [0, 0, 1, 1], [], []>} : vector<8x128xbf16>, vector<128x128xbf16>, vector<8x128xf32> -> vector<8x128xf32>
    %c0_25 = arith.constant 0 : index
    %c0_26 = arith.constant 0 : index
    %32 = vector.load %arg10[%c0_25, %c0_26] : memref<1x128xf32, #tpu.memory_space<vmem>>, vector<1x128xf32>
    %33 = vector.broadcast %32 : vector<1x128xf32> to vector<8x128xf32>
    %34 = arith.addf %31, %33 : vector<8x128xf32>
    %35 = arith.truncf %34 : vector<8x128xf32> to vector<8x128xbf16>
    %c0_27 = arith.constant 0 : index
    %c0_28 = arith.constant 0 : index
    %36 = vector.load %arg11[%c0_27, %c0_28] : memref<8x128xbf16, #tpu.memory_space<vmem>>, vector<8x128xbf16>
    tpu.vector_store %arg11[%c0_27, %c0_28], %35 {strides = array<i32>} : memref<8x128xbf16, #tpu.memory_space<vmem>>, vector<8x128xbf16>,
    return
  }
  func.func @transform_0(%arg0: i32) -> (i32, i32) {
    %c0_i32 = arith.constant 0 : i32
    %c0_i32_0 = arith.constant 0 : i32
    return %arg0, %c0_i32 : i32, i32
  }
  func.func @transform_1(%arg0: i32) -> (i32, i32) {
    %c0_i32 = arith.constant 0 : i32
    %c0_i32_0 = arith.constant 0 : i32
    %c0_i32_1 = arith.constant 0 : i32
    return %c0_i32, %c0_i32_0 : i32, i32
  }
  func.func @transform_2(%arg0: i32) -> (i32, i32) {
    %c0_i32 = arith.constant 0 : i32
    %c0_i32_0 = arith.constant 0 : i32
    %c0_i32_1 = arith.constant 0 : i32
    return %c0_i32, %c0_i32_0 : i32, i32
  }
  func.func @transform_3(%arg0: i32) -> (i32, i32) {
    %c0_i32 = arith.constant 0 : i32
    %c0_i32_0 = arith.constant 0 : i32
    %c0_i32_1 = arith.constant 0 : i32
    return %c0_i32, %c0_i32_0 : i32, i32
  }
  func.func @transform_4(%arg0: i32) -> (i32, i32) {
    %c0_i32 = arith.constant 0 : i32
    %c0_i32_0 = arith.constant 0 : i32
    %c0_i32_1 = arith.constant 0 : i32
    return %c0_i32, %c0_i32_0 : i32, i32
  }
  func.func @transform_5(%arg0: i32) -> (i32, i32) {
    %c0_i32 = arith.constant 0 : i32
    %c0_i32_0 = arith.constant 0 : i32
    %c0_i32_1 = arith.constant 0 : i32
    return %c0_i32, %c0_i32_0 : i32, i32
  }
  func.func @transform_6(%arg0: i32) -> (i32, i32) {
    %c0_i32 = arith.constant 0 : i32
    %c0_i32_0 = arith.constant 0 : i32
    %c0_i32_1 = arith.constant 0 : i32
    return %c0_i32, %c0_i32_0 : i32, i32
  }
  func.func @transform_7(%arg0: i32) -> (i32, i32) {
    %c0_i32 = arith.constant 0 : i32
    %c0_i32_0 = arith.constant 0 : i32
    %c0_i32_1 = arith.constant 0 : i32
    return %c0_i32, %c0_i32_0 : i32, i32
  }
  func.func @transform_8(%arg0: i32) -> (i32, i32) {
    %c0_i32 = arith.constant 0 : i32
    %c0_i32_0 = arith.constant 0 : i32
    %c0_i32_1 = arith.constant 0 : i32
    return %c0_i32, %c0_i32_0 : i32, i32
  }
  func.func @transform_9(%arg0: i32) -> (i32, i32) {
    %c0_i32 = arith.constant 0 : i32
    %c0_i32_0 = arith.constant 0 : i32
    %c0_i32_1 = arith.constant 0 : i32
    return %c0_i32, %c0_i32_0 : i32, i32
  }
  func.func @transform_10(%arg0: i32) -> (i32, i32) {
    %c0_i32 = arith.constant 0 : i32
    %c0_i32_0 = arith.constant 0 : i32
    return %arg0, %c0_i32 : i32, i32
  }
}

</mosaic_0001>

<llo_original>
// kernel: tpu_custom_call.1
$region0: #{tpu_custom_call.1}
  #allocation0 [shape = 'u32[]', space=smem, size = 0x4, offset = 0x4, fixed_abs, tag = 'smem constant byte address 0x4 - core index']
  #allocation1 [shape = 'u32[144,128]{1,0:T(1,128)}', space=vmem, size = 0x12000, scoped, tag = 'internal scratch']
  %s0 = inlined_call_operand.hbm [shape: bf16[8,128], index: 0, kind: input, shape index: {}]
  %s1 = inlined_call_operand.hbm [shape: bf16[128,256], index: 1, kind: input, shape index: {}]
  %s2 = inlined_call_operand.hbm [shape: bf16[256,256], index: 2, kind: input, shape index: {}]
  %s3 = inlined_call_operand.vmem [shape: f32[1,256], index: 3, kind: input, shape index: {}]
  %s4 = inlined_call_operand.hbm [shape: bf16[256,128], index: 4, kind: input, shape index: {}]
  %s5 = inlined_call_operand.vmem [shape: f32[1,128], index: 5, kind: input, shape index: {}]
  %s6 = inlined_call_operand.hbm [shape: bf16[128,128], index: 6, kind: input, shape index: {}]
  %s7 = inlined_call_operand.vmem [shape: f32[1,128], index: 7, kind: input, shape index: {}]
  %s8 = inlined_call_operand.hbm [shape: bf16[128,128], index: 8, kind: input, shape index: {}]
  %s9 = inlined_call_operand.vmem [shape: f32[1,128], index: 9, kind: input, shape index: {}]
  %s10 = inlined_call_operand.hbm [shape: bf16[8,128], index: 10, kind: output, shape index: {}]
  %s11 = sld [smem:[#allocation0]]
  $region74: #{tpu_custom_call.1} parent=0
    _
  %s13 = ssub.s32 1, %s11
  %s14 = scalar_select 0, %s13, %s11
  $region1: #{tpu_custom_call.1} parent=0
    #allocation2 [shape = 'u8[2048]{0}', space=vmem, size = 0x800, scoped, tag = 'input window, operand 0, single buffered']
    #allocation3 [shape = 's32[1]{0}', space=sflag, size = 0x4, scoped, tag = 'scoped memory for tpu_custom_call.1']
    #allocation4 [shape = 's32[1]{0}', space=sflag, size = 0x4, scoped, tag = 'scoped memory for tpu_custom_call.1']
    #allocation5 [shape = 'u8[65536]{0}', space=vmem, size = 0x10000, scoped, tag = 'input window, operand 1, single buffered']
    #allocation6 [shape = 's32[1]{0}', space=sflag, size = 0x4, scoped, tag = 'scoped memory for tpu_custom_call.1']
    #allocation7 [shape = 'u8[131072]{0}', space=vmem, size = 0x20000, scoped, tag = 'input window, operand 2, single buffered']
    #allocation8 [shape = 'u8[65536]{0}', space=vmem, size = 0x10000, scoped, tag = 'input window, operand 4, single buffered']
    #allocation9 [shape = 's32[1]{0}', space=sflag, size = 0x4, scoped, tag = 'scoped memory for tpu_custom_call.1']
    #allocation10 [shape = 'u8[32768]{0}', space=vmem, size = 0x8000, scoped, tag = 'input window, operand 6, single buffered']
    #allocation11 [shape = 'u8[32768]{0}', space=vmem, size = 0x8000, scoped, tag = 'input window, operand 8, single buffered']
    #allocation12 [shape = 's32[1]{0}', space=sflag, size = 0x4, scoped, tag = 'scoped memory for tpu_custom_call.1']
    #allocation13 [shape = 'u8[2048]{0}', space=vmem, size = 0x800, scoped, tag = 'output window, operand 0, single buffered']
    %15 = vsyncpa [#allocation3], 0
    %16 = vsyncpa [#allocation6], 0
    %17 = vsyncpa [#allocation9], 0
    %18 = vsyncpa [#allocation12], 0
    %19 = vsyncpa [#allocation4], 0
    // Predicated region
    $region2: #{tpu_custom_call.1} parent=1 // pred_check
      _
    $region3: #{tpu_custom_call.1} parent=1 // pred_check_branch
      %21 = sbr.rel (0) target = $region5
    $region4: #{tpu_custom_call.1} parent=1 // pred_region
      %s23 = ssub.s32 64, 64
      %24 = vsyncadd [#allocation3], %s23
      %s26 = sshll.u32 [#allocation2], 4
      %s27 = int_to_ptr.vmem [resolvable:$true] %s26
      %29 = dma.hbm_to_vmem [thread:$0]  %s0, 64, %s27, [#allocation3]
    $region5: #{tpu_custom_call.1} parent=1 // pred_fallthru
      _
    // Predicated region
    $region6: #{tpu_custom_call.1} parent=1 // pred_check
      _
    $region7: #{tpu_custom_call.1} parent=1 // pred_check_branch
      %31 = sbr.rel (0) target = $region9
    $region8: #{tpu_custom_call.1} parent=1 // pred_region
      %s33 = ssub.s32 2048, 2048
      %34 = vsyncadd [#allocation6], %s33
      %s35 = sshll.u32 [#allocation5], 4
      %s36 = int_to_ptr.vmem [resolvable:$true] %s35
      %41 = dma.hbm_to_vmem [thread:$0]  %s1, 2048, %s36, [#allocation6], 128, 128, 8
    $region9: #{tpu_custom_call.1} parent=1 // pred_fallthru
      _
    // Predicated region
    $region10: #{tpu_custom_call.1} parent=1 // pred_check
      _
    $region11: #{tpu_custom_call.1} parent=1 // pred_check_branch
      %43 = sbr.rel (0) target = $region13
    $region12: #{tpu_custom_call.1} parent=1 // pred_region
      %s45 = ssub.s32 4096, 4096
      %46 = vsyncadd [#allocation6], %s45
      %s47 = sshll.u32 [#allocation7], 4
      %s48 = int_to_ptr.vmem [resolvable:$true] %s47
      %53 = dma.hbm_to_vmem [thread:$0]  %s2, 4096, %s48, [#allocation6], 128, 128, 8
    $region13: #{tpu_custom_call.1} parent=1 // pred_fallthru
      _
    // Predicated region
    $region14: #{tpu_custom_call.1} parent=1 // pred_check
      _
    $region15: #{tpu_custom_call.1} parent=1 // pred_check_branch
      %55 = sbr.rel (0) target = $region17
    $region16: #{tpu_custom_call.1} parent=1 // pred_region
      _
    $region17: #{tpu_custom_call.1} parent=1 // pred_fallthru
      _
    // Predicated region
    $region18: #{tpu_custom_call.1} parent=1 // pred_check
      _
    $region19: #{tpu_custom_call.1} parent=1 // pred_check_branch
      %57 = sbr.rel (0) target = $region21
    $region20: #{tpu_custom_call.1} parent=1 // pred_region
      %s59 = ssub.s32 2048, 2048
      %60 = vsyncadd [#allocation9], %s59
      %s61 = sshll.u32 [#allocation8], 4
      %s62 = int_to_ptr.vmem [resolvable:$true] %s61
      %67 = dma.hbm_to_vmem [thread:$0]  %s4, 2048, %s62, [#allocation9], 64, 64, 4
    $region21: #{tpu_custom_call.1} parent=1 // pred_fallthru
      _
    // Predicated region
    $region22: #{tpu_custom_call.1} parent=1 // pred_check
      _
    $region23: #{tpu_custom_call.1} parent=1 // pred_check_branch
      %69 = sbr.rel (0) target = $region25
    $region24: #{tpu_custom_call.1} parent=1 // pred_region
      _
    $region25: #{tpu_custom_call.1} parent=1 // pred_fallthru
      _
    // Predicated region
    $region26: #{tpu_custom_call.1} parent=1 // pred_check
      _
    $region27: #{tpu_custom_call.1} parent=1 // pred_check_branch
      %71 = sbr.rel (0) target = $region29
    $region28: #{tpu_custom_call.1} parent=1 // pred_region
      %s73 = ssub.s32 1024, 1024
      %74 = vsyncadd [#allocation9], %s73
      %s75 = sshll.u32 [#allocation10], 4
      %s76 = int_to_ptr.vmem [resolvable:$true] %s75
      %81 = dma.hbm_to_vmem [thread:$0]  %s6, 1024, %s76, [#allocation9], 64, 64, 4
    $region29: #{tpu_custom_call.1} parent=1 // pred_fallthru
      _
    // Predicated region
    $region30: #{tpu_custom_call.1} parent=1 // pred_check
      _
    $region31: #{tpu_custom_call.1} parent=1 // pred_check_branch
      %83 = sbr.rel (0) target = $region33
    $region32: #{tpu_custom_call.1} parent=1 // pred_region
      _
    $region33: #{tpu_custom_call.1} parent=1 // pred_fallthru
      _
    // Predicated region
    $region34: #{tpu_custom_call.1} parent=1 // pred_check
      _
    $region35: #{tpu_custom_call.1} parent=1 // pred_check_branch
      %85 = sbr.rel (0) target = $region37
    $region36: #{tpu_custom_call.1} parent=1 // pred_region
      %s87 = ssub.s32 1024, 1024
      %88 = vsyncadd [#allocation12], %s87
      %s89 = sshll.u32 [#allocation11], 4
      %s90 = int_to_ptr.vmem [resolvable:$true] %s89
      %95 = dma.hbm_to_vmem [thread:$0]  %s8, 1024, %s90, [#allocation12], 64, 64, 4
    $region37: #{tpu_custom_call.1} parent=1 // pred_fallthru
      _
    // Predicated region
    $region38: #{tpu_custom_call.1} parent=1 // pred_check
      _
    $region39: #{tpu_custom_call.1} parent=1 // pred_check_branch
      %97 = sbr.rel (0) target = $region41
    $region40: #{tpu_custom_call.1} parent=1 // pred_region
      _
    $region41: #{tpu_custom_call.1} parent=1 // pred_fallthru
      _
    // Predicated region
    $region42: #{tpu_custom_call.1} parent=1 // pred_check
      _
    $region43: #{tpu_custom_call.1} parent=1 // pred_check_branch
      %99 = sbr.rel (0) target = $region45
    $region44: #{tpu_custom_call.1} parent=1 // pred_region
      %100 = dma.done [#allocation3], 64
    $region45: #{tpu_custom_call.1} parent=1 // pred_fallthru
      _
    // Predicated region
    $region46: #{tpu_custom_call.1} parent=1 // pred_check
      _
    $region47: #{tpu_custom_call.1} parent=1 // pred_check_branch
      %102 = sbr.rel (0) target = $region49
    $region48: #{tpu_custom_call.1} parent=1 // pred_region
      %103 = dma.done [#allocation6], 2048
    $region49: #{tpu_custom_call.1} parent=1 // pred_fallthru
      _
    // Predicated region
    $region50: #{tpu_custom_call.1} parent=1 // pred_check
      _
    $region51: #{tpu_custom_call.1} parent=1 // pred_check_branch
      %105 = sbr.rel (0) target = $region53
    $region52: #{tpu_custom_call.1} parent=1 // pred_region
      %106 = dma.done [#allocation6], 4096
    $region53: #{tpu_custom_call.1} parent=1 // pred_fallthru
      _
    // Predicated region
    $region54: #{tpu_custom_call.1} parent=1 // pred_check
      _
    $region55: #{tpu_custom_call.1} parent=1 // pred_check_branch
      %108 = sbr.rel (0) target = $region57
    $region56: #{tpu_custom_call.1} parent=1 // pred_region
      %109 = dma.done [#allocation9], 2048
    $region57: #{tpu_custom_call.1} parent=1 // pred_fallthru
      _
    // Predicated region
    $region58: #{tpu_custom_call.1} parent=1 // pred_check
      _
    $region59: #{tpu_custom_call.1} parent=1 // pred_check_branch
      %111 = sbr.rel (0) target = $region61
    $region60: #{tpu_custom_call.1} parent=1 // pred_region
      %112 = dma.done [#allocation9], 1024
    $region61: #{tpu_custom_call.1} parent=1 // pred_fallthru
      _
    // Predicated region
    $region62: #{tpu_custom_call.1} parent=1 // pred_check
      _
    $region63: #{tpu_custom_call.1} parent=1 // pred_check_branch
      %114 = sbr.rel (0) target = $region65
    $region64: #{tpu_custom_call.1} parent=1 // pred_region
      %115 = dma.done [#allocation12], 1024
    $region65: #{tpu_custom_call.1} parent=1 // pred_fallthru
      _
    %v117 = vld [vmem:[#allocation2] sm:$0xf]
    %v118 = vld [vmem:[#allocation5] sm:$0xff]
    %v119 = vld [vmem:[#allocation5 + $0x8] sm:$0xff]
    %v120 = vld [vmem:[#allocation5 + $0x10] sm:$0xff]
    %v121 = vld [vmem:[#allocation5 + $0x18] sm:$0xff]
    %v122 = vld [vmem:[#allocation5 + $0x20] sm:$0xff]
    %v123 = vld [vmem:[#allocation5 + $0x28] sm:$0xff]
    %v124 = vld [vmem:[#allocation5 + $0x30] sm:$0xff]
    %v125 = vld [vmem:[#allocation5 + $0x38] sm:$0xff]
    %v126 = vld [vmem:[#allocation5 + $0x40] sm:$0xff]
    %v127 = vld [vmem:[#allocation5 + $0x48] sm:$0xff]
    %v128 = vld [vmem:[#allocation5 + $0x50] sm:$0xff]
    %v129 = vld [vmem:[#allocation5 + $0x58] sm:$0xff]
    %v130 = vld [vmem:[#allocation5 + $0x60] sm:$0xff]
    %v131 = vld [vmem:[#allocation5 + $0x68] sm:$0xff]
    %v132 = vld [vmem:[#allocation5 + $0x70] sm:$0xff]
    %v133 = vld [vmem:[#allocation5 + $0x78] sm:$0xff]
    %v150 = vunpack.c.l.b16 %v118
    %v151 = vunpack.c.h.b16 %v118
    %v152 = vunpack.c.l.b16 %v119
    %v153 = vunpack.c.h.b16 %v119
    %v154 = vunpack.c.l.b16 %v120
    %v155 = vunpack.c.h.b16 %v120
    %v156 = vunpack.c.l.b16 %v121
    %v157 = vunpack.c.h.b16 %v121
    %v158 = vunpack.c.l.b16 %v122
    %v159 = vunpack.c.h.b16 %v122
    %v160 = vunpack.c.l.b16 %v123
    %v161 = vunpack.c.h.b16 %v123
    %v162 = vunpack.c.l.b16 %v124
    %v163 = vunpack.c.h.b16 %v124
    %v164 = vunpack.c.l.b16 %v125
    %v165 = vunpack.c.h.b16 %v125
    %v166 = vunpack.c.l.b16 %v126
    %v167 = vunpack.c.h.b16 %v126
    %v168 = vunpack.c.l.b16 %v127
    %v169 = vunpack.c.h.b16 %v127
    %v170 = vunpack.c.l.b16 %v128
    %v171 = vunpack.c.h.b16 %v128
    %v172 = vunpack.c.l.b16 %v129
    %v173 = vunpack.c.h.b16 %v129
    %v174 = vunpack.c.l.b16 %v130
    %v175 = vunpack.c.h.b16 %v130
    %v176 = vunpack.c.l.b16 %v131
    %v177 = vunpack.c.h.b16 %v131
    %v178 = vunpack.c.l.b16 %v132
    %v179 = vunpack.c.h.b16 %v132
    %v180 = vunpack.c.l.b16 %v133
    %v181 = vunpack.c.h.b16 %v133
    %v182 = vpack.c.b16 %v152, %v150
    %v183 = vpack.c.b16 %v153, %v151
    %v184 = vpack.c.b16 %v156, %v154
    %v185 = vpack.c.b16 %v157, %v155
    %v186 = vpack.c.b16 %v160, %v158
    %v187 = vpack.c.b16 %v161, %v159
    %v188 = vpack.c.b16 %v164, %v162
    %v189 = vpack.c.b16 %v165, %v163
    %v190 = vpack.c.b16 %v168, %v166
    %v191 = vpack.c.b16 %v169, %v167
    %v192 = vpack.c.b16 %v172, %v170
    %v193 = vpack.c.b16 %v173, %v171
    %v194 = vpack.c.b16 %v176, %v174
    %v195 = vpack.c.b16 %v177, %v175
    %v196 = vpack.c.b16 %v180, %v178
    %v197 = vpack.c.b16 %v181, %v179
    %214 = vmatprep.subr.bf16.mxu0 %v197
    %215 = vmatpush1.bf16.msra.mxu0 %v196
    %216 = vmatprep.subr.bf16.mxu0 %v195
    %217 = vmatpush1.bf16.msra.mxu0 %v194
    %218 = vmatprep.subr.bf16.mxu0 %v193
    %219 = vmatpush1.bf16.msra.mxu0 %v192
    %220 = vmatprep.subr.bf16.mxu0 %v191
    %221 = vmatpush1.bf16.msra.mxu0 %v190
    %222 = vmatprep.subr.bf16.mxu0 %v189
    %223 = vmatpush1.bf16.msra.mxu0 %v188
    %224 = vmatprep.subr.bf16.mxu0 %v187
    %225 = vmatpush1.bf16.msra.mxu0 %v186
    %226 = vmatprep.subr.bf16.mxu0 %v185
    %227 = vmatpush1.bf16.msra.mxu0 %v184
    %228 = vmatprep.subr.bf16.mxu0 %v183
    %229 = vmatpush1.bf16.msra.mxu0 %v182
    %230 = vmatprep.subr.bf16.mxu0 0
    %231 = vmatpush2.bf16.msra.mxu0 0
    %232 = vmatprep.subr.bf16.mxu0 0
    %233 = vmatpush2.bf16.msra.mxu0 0
    %234 = vmatprep.subr.bf16.mxu0 0
    %235 = vmatpush2.bf16.msra.mxu0 0
    %236 = vmatprep.subr.bf16.mxu0 0
    %237 = vmatpush2.bf16.msra.mxu0 0
    %238 = vmatprep.subr.bf16.mxu0 0
    %239 = vmatpush2.bf16.msra.mxu0 0
    %240 = vmatprep.subr.bf16.mxu0 0
    %241 = vmatpush2.bf16.msra.mxu0 0
    %242 = vmatprep.subr.bf16.mxu0 0
    %243 = vmatpush2.bf16.msra.mxu0 0
    %244 = vmatprep.subr.bf16.mxu0 0
    %245 = vmatpush2.bf16.msra.mxu0 0
    %246 = vmatprep.mubr.bf16.mxu0 0
    %247 = vmatmul.mubr.bf16.gmra.mxu0 %v117
    %v248 = vpop.f32.mrf.mxu0
    %v249 = vadd.f32 0.0, %v248
    %v250 = vpop.f32.mrf.mxu0
    %v251 = vadd.f32 0.0, %v250
    %v252 = vpop.f32.mrf.mxu0
    %v253 = vpop.f32.mrf.mxu0
    %254 = vdwg.mxu0
    %v255 = vmax.f32 %v249, 0.0
    %v256 = vmax.f32 %v251, 0.0
    %v257 = vpack.c.bf16 %v255, %v255
    %v258 = vpack.c.bf16 %v256, %v256
    %v259 = vld [vmem:[#allocation7] sm:$0xff]
    %v260 = vld [vmem:[#allocation7 + $0x8] sm:$0xff]
    %v261 = vld [vmem:[#allocation7 + $0x10] sm:$0xff]
    %v262 = vld [vmem:[#allocation7 + $0x18] sm:$0xff]
    %v263 = vld [vmem:[#allocation7 + $0x20] sm:$0xff]
    %v264 = vld [vmem:[#allocation7 + $0x28] sm:$0xff]
    %v265 = vld [vmem:[#allocation7 + $0x30] sm:$0xff]
    %v266 = vld [vmem:[#allocation7 + $0x38] sm:$0xff]
    %v267 = vld [vmem:[#allocation7 + $0x40] sm:$0xff]
    %v268 = vld [vmem:[#allocation7 + $0x48] sm:$0xff]
    %v269 = vld [vmem:[#allocation7 + $0x50] sm:$0xff]
    %v270 = vld [vmem:[#allocation7 + $0x58] sm:$0xff]
    %v271 = vld [vmem:[#allocation7 + $0x60] sm:$0xff]
    %v272 = vld [vmem:[#allocation7 + $0x68] sm:$0xff]
    %v273 = vld [vmem:[#allocation7 + $0x70] sm:$0xff]
    %v274 = vld [vmem:[#allocation7 + $0x78] sm:$0xff]
    %v275 = vld [vmem:[#allocation7 + $0x80] sm:$0xff]
    %v276 = vld [vmem:[#allocation7 + $0x88] sm:$0xff]
    %v277 = vld [vmem:[#allocation7 + $0x90] sm:$0xff]
    %v278 = vld [vmem:[#allocation7 + $0x98] sm:$0xff]
    %v279 = vld [vmem:[#allocation7 + $0xa0] sm:$0xff]
    %v280 = vld [vmem:[#allocation7 + $0xa8] sm:$0xff]
    %v281 = vld [vmem:[#allocation7 + $0xb0] sm:$0xff]
    %v282 = vld [vmem:[#allocation7 + $0xb8] sm:$0xff]
    %v283 = vld [vmem:[#allocation7 + $0xc0] sm:$0xff]
    %v284 = vld [vmem:[#allocation7 + $0xc8] sm:$0xff]
    %v285 = vld [vmem:[#allocation7 + $0xd0] sm:$0xff]
    %v286 = vld [vmem:[#allocation7 + $0xd8] sm:$0xff]
    %v287 = vld [vmem:[#allocation7 + $0xe0] sm:$0xff]
    %v288 = vld [vmem:[#allocation7 + $0xe8] sm:$0xff]
    %v289 = vld [vmem:[#allocation7 + $0xf0] sm:$0xff]
    %v290 = vld [vmem:[#allocation7 + $0xf8] sm:$0xff]
    %v291 = vld [vmem:[%s3] sm:$0x3]
    %v293 = vlaneseq
    %v294 = vshrl.u32 %v293, 7
    %v295 = vsub.s32 0, %v294
    %v296 = vrot.slane %v291, %v295
    %v297 = vlaneseq
    %v298 = vshrl.u32 %v297, 7
    %v299 = vsub.s32 1, %v298
    %v300 = vrot.slane %v291, %v299
    %v335 = vunpack.c.l.b16 %v259
    %v336 = vunpack.c.h.b16 %v259
    %v337 = vunpack.c.l.b16 %v260
    %v338 = vunpack.c.h.b16 %v260
    %v339 = vunpack.c.l.b16 %v261
    %v340 = vunpack.c.h.b16 %v261
    %v341 = vunpack.c.l.b16 %v262
    %v342 = vunpack.c.h.b16 %v262
    %v343 = vunpack.c.l.b16 %v263
    %v344 = vunpack.c.h.b16 %v263
    %v345 = vunpack.c.l.b16 %v264
    %v346 = vunpack.c.h.b16 %v264
    %v347 = vunpack.c.l.b16 %v265
    %v348 = vunpack.c.h.b16 %v265
    %v349 = vunpack.c.l.b16 %v266
    %v350 = vunpack.c.h.b16 %v266
    %v351 = vunpack.c.l.b16 %v267
    %v352 = vunpack.c.h.b16 %v267
    %v353 = vunpack.c.l.b16 %v268
    %v354 = vunpack.c.h.b16 %v268
    %v355 = vunpack.c.l.b16 %v269
    %v356 = vunpack.c.h.b16 %v269
    %v357 = vunpack.c.l.b16 %v270
    %v358 = vunpack.c.h.b16 %v270
    %v359 = vunpack.c.l.b16 %v271
    %v360 = vunpack.c.h.b16 %v271
    %v361 = vunpack.c.l.b16 %v272
    %v362 = vunpack.c.h.b16 %v272
    %v363 = vunpack.c.l.b16 %v273
    %v364 = vunpack.c.h.b16 %v273
    %v365 = vunpack.c.l.b16 %v274
    %v366 = vunpack.c.h.b16 %v274
    %v367 = vunpack.c.l.b16 %v275
    %v368 = vunpack.c.h.b16 %v275
    %v369 = vunpack.c.l.b16 %v276
    %v370 = vunpack.c.h.b16 %v276
    %v371 = vunpack.c.l.b16 %v277
    %v372 = vunpack.c.h.b16 %v277
    %v373 = vunpack.c.l.b16 %v278
    %v374 = vunpack.c.h.b16 %v278
    %v375 = vunpack.c.l.b16 %v279
    %v376 = vunpack.c.h.b16 %v279
    %v377 = vunpack.c.l.b16 %v280
    %v378 = vunpack.c.h.b16 %v280
    %v379 = vunpack.c.l.b16 %v281
    %v380 = vunpack.c.h.b16 %v281
    %v381 = vunpack.c.l.b16 %v282
    %v382 = vunpack.c.h.b16 %v282
    %v383 = vunpack.c.l.b16 %v283
    %v384 = vunpack.c.h.b16 %v283
    %v385 = vunpack.c.l.b16 %v284
    %v386 = vunpack.c.h.b16 %v284
    %v387 = vunpack.c.l.b16 %v285
    %v388 = vunpack.c.h.b16 %v285
    %v389 = vunpack.c.l.b16 %v286
    %v390 = vunpack.c.h.b16 %v286
    %v391 = vunpack.c.l.b16 %v287
    %v392 = vunpack.c.h.b16 %v287
    %v393 = vunpack.c.l.b16 %v288
    %v394 = vunpack.c.h.b16 %v288
    %v395 = vunpack.c.l.b16 %v289
    %v396 = vunpack.c.h.b16 %v289
    %v397 = vunpack.c.l.b16 %v290
    %v398 = vunpack.c.h.b16 %v290
    %v399 = vpack.c.b16 %v337, %v335
    %v400 = vpack.c.b16 %v338, %v336
    %v401 = vpack.c.b16 %v341, %v339
    %v402 = vpack.c.b16 %v342, %v340
    %v403 = vpack.c.b16 %v345, %v343
    %v404 = vpack.c.b16 %v346, %v344
    %v405 = vpack.c.b16 %v349, %v347
    %v406 = vpack.c.b16 %v350, %v348
    %v407 = vpack.c.b16 %v353, %v351
    %v408 = vpack.c.b16 %v354, %v352
    %v409 = vpack.c.b16 %v357, %v355
    %v410 = vpack.c.b16 %v358, %v356
    %v411 = vpack.c.b16 %v361, %v359
    %v412 = vpack.c.b16 %v362, %v360
    %v413 = vpack.c.b16 %v365, %v363
    %v414 = vpack.c.b16 %v366, %v364
    %v415 = vpack.c.b16 %v369, %v367
    %v416 = vpack.c.b16 %v370, %v368
    %v417 = vpack.c.b16 %v373, %v371
    %v418 = vpack.c.b16 %v374, %v372
    %v419 = vpack.c.b16 %v377, %v375
    %v420 = vpack.c.b16 %v378, %v376
    %v421 = vpack.c.b16 %v381, %v379
    %v422 = vpack.c.b16 %v382, %v380
    %v423 = vpack.c.b16 %v385, %v383
    %v424 = vpack.c.b16 %v386, %v384
    %v425 = vpack.c.b16 %v389, %v387
    %v426 = vpack.c.b16 %v390, %v388
    %v427 = vpack.c.b16 %v393, %v391
    %v428 = vpack.c.b16 %v394, %v392
    %v429 = vpack.c.b16 %v397, %v395
    %v430 = vpack.c.b16 %v398, %v396
    %463 = vmatprep.subr.bf16.mxu0 %v414
    %464 = vmatpush1.bf16.msra.mxu0 %v413
    %465 = vmatprep.subr.bf16.mxu0 %v412
    %466 = vmatpush1.bf16.msra.mxu0 %v411
    %467 = vmatprep.subr.bf16.mxu0 %v410
    %468 = vmatpush1.bf16.msra.mxu0 %v409
    %469 = vmatprep.subr.bf16.mxu0 %v408
    %470 = vmatpush1.bf16.msra.mxu0 %v407
    %471 = vmatprep.subr.bf16.mxu0 %v406
    %472 = vmatpush1.bf16.msra.mxu0 %v405
    %473 = vmatprep.subr.bf16.mxu0 %v404
    %474 = vmatpush1.bf16.msra.mxu0 %v403
    %475 = vmatprep.subr.bf16.mxu0 %v402
    %476 = vmatpush1.bf16.msra.mxu0 %v401
    %477 = vmatprep.subr.bf16.mxu0 %v400
    %478 = vmatpush1.bf16.msra.mxu0 %v399
    %479 = vmatprep.subr.bf16.mxu0 %v430
    %480 = vmatpush2.bf16.msra.mxu0 %v429
    %481 = vmatprep.subr.bf16.mxu0 %v428
    %482 = vmatpush2.bf16.msra.mxu0 %v427
    %483 = vmatprep.subr.bf16.mxu0 %v426
    %484 = vmatpush2.bf16.msra.mxu0 %v425
    %485 = vmatprep.subr.bf16.mxu0 %v424
    %486 = vmatpush2.bf16.msra.mxu0 %v423
    %487 = vmatprep.subr.bf16.mxu0 %v422
    %488 = vmatpush2.bf16.msra.mxu0 %v421
    %489 = vmatprep.subr.bf16.mxu0 %v420
    %490 = vmatpush2.bf16.msra.mxu0 %v419
    %491 = vmatprep.subr.bf16.mxu0 %v418
    %492 = vmatpush2.bf16.msra.mxu0 %v417
    %493 = vmatprep.subr.bf16.mxu0 %v416
    %494 = vmatpush2.bf16.msra.mxu0 %v415
    %495 = vmatprep.mubr.bf16.mxu0 %v258
    %496 = vmatmul.mubr.bf16.gmra.mxu0 %v257
    %v497 = vpop.f32.mrf.mxu0
    %v498 = vadd.f32 %v296, %v497
    %v499 = vpop.f32.mrf.mxu0
    %v500 = vadd.f32 %v300, %v499
    %v501 = vpop.f32.mrf.mxu0
    %v502 = vpop.f32.mrf.mxu0
    %503 = vdwg.mxu0
    %v504 = vmax.f32 %v498, 0.0
    %v505 = vmax.f32 %v500, 0.0
    %v506 = vpack.c.bf16 %v504, %v504
    %v507 = vpack.c.bf16 %v505, %v505
    %v508 = vld [vmem:[#allocation8] sm:$0xf]
    %v509 = vld [vmem:[#allocation8 + $0x4] sm:$0xf]
    %v510 = vld [vmem:[#allocation8 + $0x8] sm:$0xf]
    %v511 = vld [vmem:[#allocation8 + $0xc] sm:$0xf]
    %v512 = vld [vmem:[#allocation8 + $0x10] sm:$0xf]
    %v513 = vld [vmem:[#allocation8 + $0x14] sm:$0xf]
    %v514 = vld [vmem:[#allocation8 + $0x18] sm:$0xf]
    %v515 = vld [vmem:[#allocation8 + $0x1c] sm:$0xf]
    %v516 = vld [vmem:[#allocation8 + $0x20] sm:$0xf]
    %v517 = vld [vmem:[#allocation8 + $0x24] sm:$0xf]
    %v518 = vld [vmem:[#allocation8 + $0x28] sm:$0xf]
    %v519 = vld [vmem:[#allocation8 + $0x2c] sm:$0xf]
    %v520 = vld [vmem:[#allocation8 + $0x30] sm:$0xf]
    %v521 = vld [vmem:[#allocation8 + $0x34] sm:$0xf]
    %v522 = vld [vmem:[#allocation8 + $0x38] sm:$0xf]
    %v523 = vld [vmem:[#allocation8 + $0x3c] sm:$0xf]
    %v524 = vld [vmem:[#allocation8 + $0x40] sm:$0xf]
    %v525 = vld [vmem:[#allocation8 + $0x44] sm:$0xf]
    %v526 = vld [vmem:[#allocation8 + $0x48] sm:$0xf]
    %v527 = vld [vmem:[#allocation8 + $0x4c] sm:$0xf]
    %v528 = vld [vmem:[#allocation8 + $0x50] sm:$0xf]
    %v529 = vld [vmem:[#allocation8 + $0x54] sm:$0xf]
    %v530 = vld [vmem:[#allocation8 + $0x58] sm:$0xf]
    %v531 = vld [vmem:[#allocation8 + $0x5c] sm:$0xf]
    %v532 = vld [vmem:[#allocation8 + $0x60] sm:$0xf]
    %v533 = vld [vmem:[#allocation8 + $0x64] sm:$0xf]
    %v534 = vld [vmem:[#allocation8 + $0x68] sm:$0xf]
    %v535 = vld [vmem:[#allocation8 + $0x6c] sm:$0xf]
    %v536 = vld [vmem:[#allocation8 + $0x70] sm:$0xf]
    %v537 = vld [vmem:[#allocation8 + $0x74] sm:$0xf]
    %v538 = vld [vmem:[#allocation8 + $0x78] sm:$0xf]
    %v539 = vld [vmem:[#allocation8 + $0x7c] sm:$0xf]
    %v540 = vld [vmem:[%s5] sm:$0x1]
    %v542 = vlaneseq
    %v543 = vshrl.u32 %v542, 7
    %v544 = vsub.s32 0, %v543
    %v545 = vrot.slane %v540, %v544
    %v579 = vunpack.c.l.b16 %v508
    %v580 = vunpack.c.l.b16 %v509
    %v581 = vunpack.c.l.b16 %v510
    %v582 = vunpack.c.l.b16 %v511
    %v583 = vunpack.c.l.b16 %v512
    %v584 = vunpack.c.l.b16 %v513
    %v585 = vunpack.c.l.b16 %v514
    %v586 = vunpack.c.l.b16 %v515
    %v587 = vunpack.c.l.b16 %v516
    %v588 = vunpack.c.l.b16 %v517
    %v589 = vunpack.c.l.b16 %v518
    %v590 = vunpack.c.l.b16 %v519
    %v591 = vunpack.c.l.b16 %v520
    %v592 = vunpack.c.l.b16 %v521
    %v593 = vunpack.c.l.b16 %v522
    %v594 = vunpack.c.l.b16 %v523
    %v595 = vunpack.c.l.b16 %v524
    %v596 = vunpack.c.l.b16 %v525
    %v597 = vunpack.c.l.b16 %v526
    %v598 = vunpack.c.l.b16 %v527
    %v599 = vunpack.c.l.b16 %v528
    %v600 = vunpack.c.l.b16 %v529
    %v601 = vunpack.c.l.b16 %v530
    %v602 = vunpack.c.l.b16 %v531
    %v603 = vunpack.c.l.b16 %v532
    %v604 = vunpack.c.l.b16 %v533
    %v605 = vunpack.c.l.b16 %v534
    %v606 = vunpack.c.l.b16 %v535
    %v607 = vunpack.c.l.b16 %v536
    %v608 = vunpack.c.l.b16 %v537
    %v609 = vunpack.c.l.b16 %v538
    %v610 = vunpack.c.l.b16 %v539
    %v611 = vpack.c.b16 %v580, %v579
    %v612 = vpack.c.b16 %v582, %v581
    %v613 = vpack.c.b16 %v584, %v583
    %v614 = vpack.c.b16 %v586, %v585
    %v615 = vpack.c.b16 %v588, %v587
    %v616 = vpack.c.b16 %v590, %v589
    %v617 = vpack.c.b16 %v592, %v591
    %v618 = vpack.c.b16 %v594, %v593
    %v619 = vpack.c.b16 %v596, %v595
    %v620 = vpack.c.b16 %v598, %v597
    %v621 = vpack.c.b16 %v600, %v599
    %v622 = vpack.c.b16 %v602, %v601
    %v623 = vpack.c.b16 %v604, %v603
    %v624 = vpack.c.b16 %v606, %v605
    %v625 = vpack.c.b16 %v608, %v607
    %v626 = vpack.c.b16 %v610, %v609
    %643 = vmatprep.subr.bf16.mxu0 0
    %644 = vmatpush1.bf16.msra.mxu0 %v618
    %645 = vmatprep.subr.bf16.mxu0 0
    %646 = vmatpush1.bf16.msra.mxu0 %v617
    %647 = vmatprep.subr.bf16.mxu0 0
    %648 = vmatpush1.bf16.msra.mxu0 %v616
    %649 = vmatprep.subr.bf16.mxu0 0
    %650 = vmatpush1.bf16.msra.mxu0 %v615
    %651 = vmatprep.subr.bf16.mxu0 0
    %652 = vmatpush1.bf16.msra.mxu0 %v614
    %653 = vmatprep.subr.bf16.mxu0 0
    %654 = vmatpush1.bf16.msra.mxu0 %v613
    %655 = vmatprep.subr.bf16.mxu0 0
    %656 = vmatpush1.bf16.msra.mxu0 %v612
    %657 = vmatprep.subr.bf16.mxu0 0
    %658 = vmatpush1.bf16.msra.mxu0 %v611
    %659 = vmatprep.subr.bf16.mxu0 0
    %660 = vmatpush2.bf16.msra.mxu0 %v626
    %661 = vmatprep.subr.bf16.mxu0 0
    %662 = vmatpush2.bf16.msra.mxu0 %v625
    %663 = vmatprep.subr.bf16.mxu0 0
    %664 = vmatpush2.bf16.msra.mxu0 %v624
    %665 = vmatprep.subr.bf16.mxu0 0
    %666 = vmatpush2.bf16.msra.mxu0 %v623
    %667 = vmatprep.subr.bf16.mxu0 0
    %668 = vmatpush2.bf16.msra.mxu0 %v622
    %669 = vmatprep.subr.bf16.mxu0 0
    %670 = vmatpush2.bf16.msra.mxu0 %v621
    %671 = vmatprep.subr.bf16.mxu0 0
    %672 = vmatpush2.bf16.msra.mxu0 %v620
    %673 = vmatprep.subr.bf16.mxu0 0
    %674 = vmatpush2.bf16.msra.mxu0 %v619
    %675 = vmatprep.mubr.bf16.mxu0 %v507
    %676 = vmatmul.mubr.bf16.gmra.mxu0 %v506
    %v677 = vpop.f32.mrf.mxu0
    %v678 = vadd.f32 %v545, %v677
    %v679 = vpop.f32.mrf.mxu0
    %v680 = vpop.f32.mrf.mxu0
    %v681 = vpop.f32.mrf.mxu0
    %682 = vdwg.mxu0
    %v683 = vmax.f32 %v678, 0.0
    %v684 = vpack.c.bf16 %v683, %v683
    %v685 = vld [vmem:[#allocation10] sm:$0xf]
    %v686 = vld [vmem:[#allocation10 + $0x4] sm:$0xf]
    %v687 = vld [vmem:[#allocation10 + $0x8] sm:$0xf]
    %v688 = vld [vmem:[#allocation10 + $0xc] sm:$0xf]
    %v689 = vld [vmem:[#allocation10 + $0x10] sm:$0xf]
    %v690 = vld [vmem:[#allocation10 + $0x14] sm:$0xf]
    %v691 = vld [vmem:[#allocation10 + $0x18] sm:$0xf]
    %v692 = vld [vmem:[#allocation10 + $0x1c] sm:$0xf]
    %v693 = vld [vmem:[#allocation10 + $0x20] sm:$0xf]
    %v694 = vld [vmem:[#allocation10 + $0x24] sm:$0xf]
    %v695 = vld [vmem:[#allocation10 + $0x28] sm:$0xf]
    %v696 = vld [vmem:[#allocation10 + $0x2c] sm:$0xf]
    %v697 = vld [vmem:[#allocation10 + $0x30] sm:$0xf]
    %v698 = vld [vmem:[#allocation10 + $0x34] sm:$0xf]
    %v699 = vld [vmem:[#allocation10 + $0x38] sm:$0xf]
    %v700 = vld [vmem:[#allocation10 + $0x3c] sm:$0xf]
    %v701 = vld [vmem:[%s7] sm:$0x1]
    %v703 = vlaneseq
    %v704 = vshrl.u32 %v703, 7
    %v705 = vsub.s32 0, %v704
    %v706 = vrot.slane %v701, %v705
    %v724 = vunpack.c.l.b16 %v685
    %v725 = vunpack.c.l.b16 %v686
    %v726 = vunpack.c.l.b16 %v687
    %v727 = vunpack.c.l.b16 %v688
    %v728 = vunpack.c.l.b16 %v689
    %v729 = vunpack.c.l.b16 %v690
    %v730 = vunpack.c.l.b16 %v691
    %v731 = vunpack.c.l.b16 %v692
    %v732 = vunpack.c.l.b16 %v693
    %v733 = vunpack.c.l.b16 %v694
    %v734 = vunpack.c.l.b16 %v695
    %v735 = vunpack.c.l.b16 %v696
    %v736 = vunpack.c.l.b16 %v697
    %v737 = vunpack.c.l.b16 %v698
    %v738 = vunpack.c.l.b16 %v699
    %v739 = vunpack.c.l.b16 %v700
    %v740 = vpack.c.b16 %v725, %v724
    %v741 = vpack.c.b16 %v727, %v726
    %v742 = vpack.c.b16 %v729, %v728
    %v743 = vpack.c.b16 %v731, %v730
    %v744 = vpack.c.b16 %v733, %v732
    %v745 = vpack.c.b16 %v735, %v734
    %v746 = vpack.c.b16 %v737, %v736
    %v747 = vpack.c.b16 %v739, %v738
    %756 = vmatprep.subr.bf16.mxu0 0
    %757 = vmatpush1.bf16.msra.mxu0 %v747
    %758 = vmatprep.subr.bf16.mxu0 0
    %759 = vmatpush1.bf16.msra.mxu0 %v746
    %760 = vmatprep.subr.bf16.mxu0 0
    %761 = vmatpush1.bf16.msra.mxu0 %v745
    %762 = vmatprep.subr.bf16.mxu0 0
    %763 = vmatpush1.bf16.msra.mxu0 %v744
    %764 = vmatprep.subr.bf16.mxu0 0
    %765 = vmatpush1.bf16.msra.mxu0 %v743
    %766 = vmatprep.subr.bf16.mxu0 0
    %767 = vmatpush1.bf16.msra.mxu0 %v742
    %768 = vmatprep.subr.bf16.mxu0 0
    %769 = vmatpush1.bf16.msra.mxu0 %v741
    %770 = vmatprep.subr.bf16.mxu0 0
    %771 = vmatpush1.bf16.msra.mxu0 %v740
    %772 = vmatprep.subr.bf16.mxu0 0
    %773 = vmatpush2.bf16.msra.mxu0 0
    %774 = vmatprep.subr.bf16.mxu0 0
    %775 = vmatpush2.bf16.msra.mxu0 0
    %776 = vmatprep.subr.bf16.mxu0 0
    %777 = vmatpush2.bf16.msra.mxu0 0
    %778 = vmatprep.subr.bf16.mxu0 0
    %779 = vmatpush2.bf16.msra.mxu0 0
    %780 = vmatprep.subr.bf16.mxu0 0
    %781 = vmatpush2.bf16.msra.mxu0 0
    %782 = vmatprep.subr.bf16.mxu0 0
    %783 = vmatpush2.bf16.msra.mxu0 0
    %784 = vmatprep.subr.bf16.mxu0 0
    %785 = vmatpush2.bf16.msra.mxu0 0
    %786 = vmatprep.subr.bf16.mxu0 0
    %787 = vmatpush2.bf16.msra.mxu0 0
    %788 = vmatprep.mubr.bf16.mxu0 0
    %789 = vmatmul.mubr.bf16.gmra.mxu0 %v684
    %v790 = vpop.f32.mrf.mxu0
    %v791 = vadd.f32 %v706, %v790
    %v792 = vpop.f32.mrf.mxu0
    %v793 = vpop.f32.mrf.mxu0
    %v794 = vpop.f32.mrf.mxu0
    %795 = vdwg.mxu0
    %v796 = vmax.f32 %v791, 0.0
    %v797 = vpack.c.bf16 %v796, %v796
    %v798 = vld [vmem:[#allocation11] sm:$0xf]
    %v799 = vld [vmem:[#allocation11 + $0x4] sm:$0xf]
    %v800 = vld [vmem:[#allocation11 + $0x8] sm:$0xf]
    %v801 = vld [vmem:[#allocation11 + $0xc] sm:$0xf]
    %v802 = vld [vmem:[#allocation11 + $0x10] sm:$0xf]
    %v803 = vld [vmem:[#allocation11 + $0x14] sm:$0xf]
    %v804 = vld [vmem:[#allocation11 + $0x18] sm:$0xf]
    %v805 = vld [vmem:[#allocation11 + $0x1c] sm:$0xf]
    %v806 = vld [vmem:[#allocation11 + $0x20] sm:$0xf]
    %v807 = vld [vmem:[#allocation11 + $0x24] sm:$0xf]
    %v808 = vld [vmem:[#allocation11 + $0x28] sm:$0xf]
    %v809 = vld [vmem:[#allocation11 + $0x2c] sm:$0xf]
    %v810 = vld [vmem:[#allocation11 + $0x30] sm:$0xf]
    %v811 = vld [vmem:[#allocation11 + $0x34] sm:$0xf]
    %v812 = vld [vmem:[#allocation11 + $0x38] sm:$0xf]
    %v813 = vld [vmem:[#allocation11 + $0x3c] sm:$0xf]
    %v814 = vld [vmem:[%s9] sm:$0x1]
    %v816 = vlaneseq
    %v817 = vshrl.u32 %v816, 7
    %v818 = vsub.s32 0, %v817
    %v819 = vrot.slane %v814, %v818
    %v837 = vunpack.c.l.b16 %v798
    %v838 = vunpack.c.l.b16 %v799
    %v839 = vunpack.c.l.b16 %v800
    %v840 = vunpack.c.l.b16 %v801
    %v841 = vunpack.c.l.b16 %v802
    %v842 = vunpack.c.l.b16 %v803
    %v843 = vunpack.c.l.b16 %v804
    %v844 = vunpack.c.l.b16 %v805
    %v845 = vunpack.c.l.b16 %v806
    %v846 = vunpack.c.l.b16 %v807
    %v847 = vunpack.c.l.b16 %v808
    %v848 = vunpack.c.l.b16 %v809
    %v849 = vunpack.c.l.b16 %v810
    %v850 = vunpack.c.l.b16 %v811
    %v851 = vunpack.c.l.b16 %v812
    %v852 = vunpack.c.l.b16 %v813
    %v853 = vpack.c.b16 %v838, %v837
    %v854 = vpack.c.b16 %v840, %v839
    %v855 = vpack.c.b16 %v842, %v841
    %v856 = vpack.c.b16 %v844, %v843
    %v857 = vpack.c.b16 %v846, %v845
    %v858 = vpack.c.b16 %v848, %v847
    %v859 = vpack.c.b16 %v850, %v849
    %v860 = vpack.c.b16 %v852, %v851
    %869 = vmatprep.subr.bf16.mxu0 0
    %870 = vmatpush1.bf16.msra.mxu0 %v860
    %871 = vmatprep.subr.bf16.mxu0 0
    %872 = vmatpush1.bf16.msra.mxu0 %v859
    %873 = vmatprep.subr.bf16.mxu0 0
    %874 = vmatpush1.bf16.msra.mxu0 %v858
    %875 = vmatprep.subr.bf16.mxu0 0
    %876 = vmatpush1.bf16.msra.mxu0 %v857
    %877 = vmatprep.subr.bf16.mxu0 0
    %878 = vmatpush1.bf16.msra.mxu0 %v856
    %879 = vmatprep.subr.bf16.mxu0 0
    %880 = vmatpush1.bf16.msra.mxu0 %v855
    %881 = vmatprep.subr.bf16.mxu0 0
    %882 = vmatpush1.bf16.msra.mxu0 %v854
    %883 = vmatprep.subr.bf16.mxu0 0
    %884 = vmatpush1.bf16.msra.mxu0 %v853
    %885 = vmatprep.subr.bf16.mxu0 0
    %886 = vmatpush2.bf16.msra.mxu0 0
    %887 = vmatprep.subr.bf16.mxu0 0
    %888 = vmatpush2.bf16.msra.mxu0 0
    %889 = vmatprep.subr.bf16.mxu0 0
    %890 = vmatpush2.bf16.msra.mxu0 0
    %891 = vmatprep.subr.bf16.mxu0 0
    %892 = vmatpush2.bf16.msra.mxu0 0
    %893 = vmatprep.subr.bf16.mxu0 0
    %894 = vmatpush2.bf16.msra.mxu0 0
    %895 = vmatprep.subr.bf16.mxu0 0
    %896 = vmatpush2.bf16.msra.mxu0 0
    %897 = vmatprep.subr.bf16.mxu0 0
    %898 = vmatpush2.bf16.msra.mxu0 0
    %899 = vmatprep.subr.bf16.mxu0 0
    %900 = vmatpush2.bf16.msra.mxu0 0
    %901 = vmatprep.mubr.bf16.mxu0 0
    %902 = vmatmul.mubr.bf16.gmra.mxu0 %v797
    %v903 = vpop.f32.mrf.mxu0
    %v904 = vadd.f32 %v819, %v903
    %v905 = vpop.f32.mrf.mxu0
    %v906 = vpop.f32.mrf.mxu0
    %v907 = vpop.f32.mrf.mxu0
    %908 = vdwg.mxu0
    %v909 = vpack.c.bf16 %v904, %v904
    %910 = vst [vmem:[#allocation13] sm:$0xf] %v909
    // Predicated region
    $region66: #{tpu_custom_call.1} parent=1 // pred_check
      _
    $region67: #{tpu_custom_call.1} parent=1 // pred_check_branch
      %912 = sbr.rel (0) target = $region69
    $region68: #{tpu_custom_call.1} parent=1 // pred_region
      %s914 = ssub.s32 64, 64
      %915 = vsyncadd [#allocation4], %s914
      %s917 = sshll.u32 [#allocation13], 4
      %s918 = int_to_ptr.vmem [resolvable:$true] %s917
      %920 = dma.vmem_to_hbm [thread:$0]  %s918, 64, %s10, [#allocation4]
    $region69: #{tpu_custom_call.1} parent=1 // pred_fallthru
      _
    // Predicated region
    $region70: #{tpu_custom_call.1} parent=1 // pred_check
      _
    $region71: #{tpu_custom_call.1} parent=1 // pred_check_branch
      %922 = sbr.rel (0) target = $region73
    $region72: #{tpu_custom_call.1} parent=1 // pred_region
      %923 = dma.done [#allocation4], 64
    $region73: #{tpu_custom_call.1} parent=1 // pred_fallthru
      _
    %924 = vsyncpa [#allocation3], 1
    %925 = vsyncpa [#allocation6], 1
    %926 = vsyncpa [#allocation9], 1
    %927 = vsyncpa [#allocation12], 1
    %928 = vsyncpa [#allocation4], 1

</llo_original>
